<compile_context>
chip_gen: v7x
topology: tpu7x:2x2x1
jax: 0.10.0
libtpu: 0.0.40
codegen_flags: <defaults>
</compile_context>

<pallas_src>
import functools

import jax
import jax.numpy as jnp
from jax import lax
from jax.experimental import pallas as pl
from jax.experimental.pallas import tpu as pltpu


def _round_up(x, m):
    return ((x + m - 1) // m) * m


def _ts_zscore_kernel(x_ref, o_ref, *, d, stride, w):
    # x_ref: (Rt, T) rows of the flattened (batch*n, T) input (original dtype)
    # o_ref: (Rt, w) lane-organized z-score tile (f32)
    T = x_ref.shape[1]
    x = x_ref[...].astype(jnp.float32)                      # cast after load

    # Static 0/1 window selector (T, w), built in-kernel (no HBM input, no
    # double-buffered VMEM footprint). Column i selects [i*stride, i*stride+d).
    t_idx = lax.broadcasted_iota(jnp.int32, (T, w), 0)
    i_idx = lax.broadcasted_iota(jnp.int32, (T, w), 1)
    start = i_idx * stride
    sel = jnp.where((t_idx >= start) & (t_idx < start + d), 1.0, 0.0)

    # Coarse per-row centering keeps the E[x^2]-E[x]^2 path numerically stable
    # when |mean| >> std; the z-score itself is still computed on the raw x.
    row_mean = jnp.mean(x, axis=1, keepdims=True)           # (Rt, 1)
    xc = x - row_mean

    inv_d = 1.0 / d
    # Two MXU matmuls give all window sums / sums-of-squares at once.
    s1 = jnp.dot(xc, sel, preferred_element_type=jnp.float32,
                 precision=lax.Precision.HIGHEST)           # (Rt, w)
    s2 = jnp.dot(xc * xc, sel, preferred_element_type=jnp.float32,
                 precision=lax.Precision.HIGHEST)           # (Rt, w)

    win_mean_c = s1 * inv_d
    mean = win_mean_c + row_mean                            # true window mean
    var = (s2 - s1 * win_mean_c) * (1.0 / (d - 1))          # unbiased (torch.std)
    var = jnp.maximum(var, 0.0)                             # guard rounding -> rsqrt(neg)
    # var == 0 (constant window) -> inf, same sign as mean, matching torch mean/std.
    o_ref[...] = (mean * lax.rsqrt(var)).astype(o_ref.dtype)


def ts_zscore(x, d=10, stride=10, *, max_row_tile=2048, target_block_bytes=8 << 20):
    batch, n, T = x.shape
    w = (T - d) // stride + 1
    rows = batch * n

    # Free reshape (contiguous); no dtype cast, no pad -> no extra HBM traffic.
    xf = x.reshape(rows, T)

    # Row tile: multiple of 8 sublanes, sized by a ~8 MiB VMEM budget per block
    # (double-buffered it stays well under v7x's 64 MiB / the scoped limit), but
    # capped so the grid keeps >= 2 steps when possible (v7x has 2 TensorCores).
    itemsize = jnp.dtype(x.dtype).itemsize
    by_vmem = max(8, (target_block_bytes // (T * itemsize)) // 8 * 8)
    rt = int(min(max_row_tile, by_vmem))
    if rows > 8:
        rt = min(rt, _round_up(-(-rows // 2), 8))
    rt = max(8, min(rt, _round_up(rows, 8)))
    grid = -(-rows // rt)  # ragged last block is handled by Pallas (masked store)

    # TODO(synk): for dense windows (stride << d, very large T*w) add a second
    # grid axis tiling w so the (Rt, w) output/selector stay within VMEM.

    kernel = functools.partial(_ts_zscore_kernel, d=d, stride=stride, w=w)
    out = pl.pallas_call(
        kernel,
        out_shape=jax.ShapeDtypeStruct((rows, w), jnp.float32),
        grid_spec=pltpu.PrefetchScalarGridSpec(
            num_scalar_prefetch=0,
            grid=(grid,),
            in_specs=[pl.BlockSpec((rt, T), lambda r: (r, 0))],
            out_specs=pl.BlockSpec((rt, w), lambda r: (r, 0)),
        ),
        compiler_params=pltpu.CompilerParams(
            dimension_semantics=("parallel",),
            vmem_limit_bytes=48 * 1024 * 1024,
        ),
    )(xf)

    return out.reshape(batch, n, w)


def _reference(x, d=10, stride=10):
    batch, n, T = x.shape
    w = (T - d) // stride + 1
    outs = []
    for i in range(w):
        xw = x[:, :, i * stride: i * stride + d].astype(jnp.float32)
        mean = jnp.mean(xw, axis=-1)
        std = jnp.sqrt(jnp.sum((xw - mean[..., None]) ** 2, axis=-1) / (d - 1))
        outs.append(mean / std)
    return jnp.stack(outs, axis=-1)


if __name__ == "__main__":
    key = jax.random.PRNGKey(0)
    batch, n, T = 2, 8, 64          # d=10, stride=10 -> w = 6
    x = jax.random.normal(key, (batch, n, T), dtype=jnp.float32)

    z = ts_zscore(x, d=10, stride=10)
    jax.block_until_ready(z)

    z_ref = _reference(x, d=10, stride=10)
    assert z.shape == z_ref.shape == (batch, n, 6)
    assert jnp.allclose(z, z_ref, atol=1e-4, rtol=1e-4)
    print("KERNEL_OK")
</pallas_src>

<mosaic_0001>
module attributes {stable_mosaic.version = 11 : i64} {
  func.func @_ts_zscore_kernel(%arg0: i32, %arg1: memref<8x64xf32, #tpu.memory_space<vmem>>, %arg2: memref<8x6xf32, #tpu.memory_space<vmem>>) attributes {dimension_semantics = [#tpu.dimension_semantics<parallel>], iteration_bounds = array<i64: 2>, scalar_prefetch = 0 : i64, scratch_operands = 0 : i64, tpu.core_type = #tpu.core_type<tc>, window_params = [{transform_indices = @transform_0, window_bounds = array<i64: 8, 64>}, {transform_indices = @transform_1, window_bounds = array<i64: 8, 6>}]} {
    %c0 = arith.constant 0 : index
    %c0_0 = arith.constant 0 : index
    %0 = vector.load %arg1[%c0, %c0_0] : memref<8x64xf32, #tpu.memory_space<vmem>>, vector<8x64xf32>
    %1 = tpu.iota {dimensions = array<i32: 0>} : vector<64x6xi32>
    %2 = tpu.iota {dimensions = array<i32: 1>} : vector<64x6xi32>
    %c10_i32 = arith.constant 10 : i32
    %3 = vector.broadcast %c10_i32 : i32 to vector<64x6xi32>
    %4 = arith.muli %2, %3 : vector<64x6xi32>
    %5 = arith.cmpi sge, %1, %4 : vector<64x6xi32>
    %c10_i32_1 = arith.constant 10 : i32
    %6 = vector.broadcast %c10_i32_1 : i32 to vector<64x6xi32>
    %7 = arith.addi %4, %6 : vector<64x6xi32>
    %8 = arith.cmpi slt, %1, %7 : vector<64x6xi32>
    %9 = arith.andi %5, %8 : vector<64x6xi1>
    %cst = arith.constant 1.000000e+00 : f32
    %cst_2 = arith.constant 0.000000e+00 : f32
    %10 = vector.broadcast %cst : f32 to vector<64x6xf32>
    %11 = vector.broadcast %cst_2 : f32 to vector<64x6xf32>
    %12 = arith.select %9, %10, %11 : vector<64x6xi1>, vector<64x6xf32>
    %cst_3 = arith.constant dense<0.000000e+00> : vector<8xf32>
    %13 = vector.multi_reduction <add>, %0, %cst_3 [1] : vector<8x64xf32> to vector<8xf32>
    %14 = vector.shape_cast %13 : vector<8xf32> to vector<8x1xf32>
    %cst_4 = arith.constant 6.400000e+01 : f32
    %15 = vector.broadcast %cst_4 : f32 to vector<8x1xf32>
    %16 = arith.divf %14, %15 : vector<8x1xf32>
    %17 = vector.broadcast %16 : vector<8x1xf32> to vector<8x64xf32>
    %18 = arith.subf %0, %17 : vector<8x64xf32>
    %cst_5 = arith.constant dense<0.000000e+00> : vector<8x6xf32>
    %19 = tpu.matmul %18, %12, %cst_5 {dimension_numbers = #tpu.dot_dimension_numbers<[1], [0], [0], [1], [0, 0, 1, 1], [], []>, precision = #tpu.contract_precision<fp32>} : vector<8x64xf32>, vector<64x6xf32>, vector<8x6xf32> -> vector<8x6xf32>
    %20 = arith.mulf %18, %18 : vector<8x64xf32>
    %cst_6 = arith.constant dense<0.000000e+00> : vector<8x6xf32>
    %21 = tpu.matmul %20, %12, %cst_6 {dimension_numbers = #tpu.dot_dimension_numbers<[1], [0], [0], [1], [0, 0, 1, 1], [], []>, precision = #tpu.contract_precision<fp32>} : vector<8x64xf32>, vector<64x6xf32>, vector<8x6xf32> -> vector<8x6xf32>
    %cst_7 = arith.constant 1.000000e-01 : f32
    %22 = vector.broadcast %cst_7 : f32 to vector<8x6xf32>
    %23 = arith.mulf %19, %22 : vector<8x6xf32>
    %24 = vector.broadcast %16 : vector<8x1xf32> to vector<8x6xf32>
    %25 = arith.addf %23, %24 : vector<8x6xf32>
    %26 = arith.mulf %19, %23 : vector<8x6xf32>
    %27 = arith.subf %21, %26 : vector<8x6xf32>
    %cst_8 = arith.constant 0.111111112 : f32
    %28 = vector.broadcast %cst_8 : f32 to vector<8x6xf32>
    %29 = arith.mulf %27, %28 : vector<8x6xf32>
    %cst_9 = arith.constant 0.000000e+00 : f32
    %30 = vector.broadcast %cst_9 : f32 to vector<8x6xf32>
    %31 = arith.maximumf %29, %30 : vector<8x6xf32>
    %32 = math.rsqrt %31 : vector<8x6xf32>
    %33 = arith.mulf %25, %32 : vector<8x6xf32>
    %c0_10 = arith.constant 0 : index
    %c0_11 = arith.constant 0 : index
    %34 = vector.load %arg2[%c0_10, %c0_11] : memref<8x6xf32, #tpu.memory_space<vmem>>, vector<8x6xf32>
    tpu.vector_store %arg2[%c0_10, %c0_11], %33 {strides = array<i32>} : memref<8x6xf32, #tpu.memory_space<vmem>>, vector<8x6xf32>,
    return
  }
  func.func @transform_0(%arg0: i32) -> (i32, i32) {
    %c0_i32 = arith.constant 0 : i32
    %c0_i32_0 = arith.constant 0 : i32
    return %arg0, %c0_i32 : i32, i32
  }
  func.func @transform_1(%arg0: i32) -> (i32, i32) {
    %c0_i32 = arith.constant 0 : i32
    %c0_i32_0 = arith.constant 0 : i32
    return %arg0, %c0_i32 : i32, i32
  }
}

</mosaic_0001>

<llo_original>
// kernel: tpu_custom_call.1
$region0: #{tpu_custom_call.1}
  #allocation0 [shape = 'u32[]', space=smem, size = 0x4, offset = 0x4, fixed_abs, tag = 'smem constant byte address 0x4 - core index']
  #allocation1 [shape = 'u32[144,128]{1,0:T(1,128)}', space=vmem, size = 0x12000, scoped, tag = 'internal scratch']
  %s0 = inlined_call_operand.hbm [shape: f32[16,64], index: 0, kind: input, shape index: {}]
  %s1 = inlined_call_operand.vmem [shape: f32[16,6], index: 1, kind: output, shape index: {}]
  %s2 = sld [smem:[#allocation0]]
  $region41: #{tpu_custom_call.1} parent=0
    _
  %s4 = ssub.s32 1, %s2
  %s5 = scalar_select 0, %s4, %s2
  $region1: #{tpu_custom_call.1} parent=0
    #allocation2 [shape = 'u8[8192]{0}', space=vmem, size = 0x2000, scoped, tag = 'input window, operand 0']
    #allocation3 [shape = 's32[2]{0}', space=sflag, size = 0x8, scoped, tag = 'scoped memory for tpu_custom_call.1']
    %6 = vsyncpa [#allocation3], 0
    %s7 = scalar_lea.sflag [#allocation3], 1
    %8 = vsyncpa %s7, 0
    loop: start=0, step=1, limit=4
    $region2: #{tpu_custom_call.1} parent=1 // loop_pre_header
      _
    $region3: #{tpu_custom_call.1} parent=1 // loop_header
      %s10 = sphi 0, %s14
      %p11 = scmp.ge.s32.totalorder %s10, 4
      %s20 = sphi 0, %s22
      %s23 = sphi 0, %s20
      %s24 = sphi 0, %s23
      %s40 = sphi 0, %s24
      %s46 = sphi 0, %s48
      %s49 = sphi 0, %s46
      %s50 = sphi 0, %s49
      %s66 = sphi 0, %s50
    $region4: #{tpu_custom_call.1} parent=1 // loop_header_branch
      %13 = sbr.rel (%p11) target = $region8
    $region5: #{tpu_custom_call.1} parent=1 // loop_body
      %s15 = ssub.s32 %s10, 1
      %s16 = ssub.s32 %s10, 2
      %s17 = sadd.s32 %s10, 1
      %s18 = ssub.s32 %s10, %s17
      %p19 = scmp.eq.s32.totalorder %s18, 0
      %s21 = sadd.s32 %s20, 1
      %s22 = scalar_select %p19, %s20, %s21
      %p25 = pneg %p19
      %p26 = scmp.eq.s32.totalorder %s10, 1
      %p27 = por %p25, %p26
      %p28 = scmp.ne.s32.totalorder %s20, %s23
      %p29 = scmp.eq.s32.totalorder %s10, 0
      %p30 = por %p28, %p29
      %p31 = scmp.ne.s32.totalorder %s20, %s23
      %p32 = scmp.eq.s32.totalorder %s15, 1
      %p33 = por %p31, %p32
      %p34 = scmp.ne.s32.totalorder %s23, %s24
      %p35 = scmp.eq.s32.totalorder %s15, 0
      %p36 = por %p34, %p35
      %p37 = scmp.ne.s32.totalorder %s23, %s24
      %p38 = scmp.eq.s32.totalorder %s16, 1
      %p39 = por %p37, %p38
      %p41 = scmp.ne.s32.totalorder %s24, %s40
      %p42 = scmp.eq.s32.totalorder %s16, 0
      %p43 = por %p41, %p42
      %s44 = ssub.s32 %s10, %s17
      %p45 = scmp.eq.s32.totalorder %s44, 0
      %s47 = sadd.s32 %s46, 1
      %s48 = scalar_select %p45, %s46, %s47
      %p51 = pneg %p45
      %p52 = scmp.eq.s32.totalorder %s10, 1
      %p53 = por %p51, %p52
      %p54 = scmp.ne.s32.totalorder %s46, %s49
      %p55 = scmp.eq.s32.totalorder %s10, 0
      %p56 = por %p54, %p55
      %p57 = scmp.ne.s32.totalorder %s46, %s49
      %p58 = scmp.eq.s32.totalorder %s15, 1
      %p59 = por %p57, %p58
      %p60 = scmp.ne.s32.totalorder %s49, %s50
      %p61 = scmp.eq.s32.totalorder %s15, 0
      %p62 = por %p60, %p61
      %p63 = scmp.ne.s32.totalorder %s49, %s50
      %p64 = scmp.eq.s32.totalorder %s16, 1
      %p65 = por %p63, %p64
      %p67 = scmp.ne.s32.totalorder %s50, %s66
      %p68 = scmp.eq.s32.totalorder %s16, 0
      %p69 = por %p67, %p68
      %p70 = scmp.le.s32.totalorder 1, %s10
      %p71 = scmp.lt.s32.totalorder %s10, 3
      %p72 = pnand %p70, %p71
      %p73 = pneg %p72
      // Predicated region
      $region9: #{tpu_custom_call.1} parent=5 // pred_check
        _
      $region10: #{tpu_custom_call.1} parent=5 // pred_check_branch
        %75 = sbr.rel (%p72) target = $region12
      $region11: #{tpu_custom_call.1} parent=5 // pred_region
        %s76 = ssub.s32 %s10, 1
      $region12: #{tpu_custom_call.1} parent=5 // pred_fallthru
        _
      %p77 = scmp.lt.s32.totalorder %s10, 2
      // Predicated region
      $region13: #{tpu_custom_call.1} parent=5 // pred_check
        %p78 = pneg %p77
      $region14: #{tpu_custom_call.1} parent=5 // pred_check_branch
        %80 = sbr.rel (%p78) target = $region16
      $region15: #{tpu_custom_call.1} parent=5 // pred_region
        // Predicated region
        $region17: #{tpu_custom_call.1} parent=15 // pred_check
          %p81 = pneg %p30
        $region18: #{tpu_custom_call.1} parent=15 // pred_check_branch
          %83 = sbr.rel (%p81) target = $region20
        $region19: #{tpu_custom_call.1} parent=15 // pred_region
          %s84 = sand.u32 %s20, 1
          %s85 = scalar_lea.sflag [#allocation3], %s84
          %s86 = sand.u32 %s20, 1
          %s87 = smul.addr %s86, 8
          %s88 = scalar_lea.vmem [#allocation2], %s87
          %s90 = ssub.s32 128, 128
          %91 = vsyncadd %s85, %s90
          %s92 = smul.addr %s10, 128
          %s93 = scalar_lea.hbm %s0, %s92
          %s95 = sshll.u32 %s88, 4
          %s96 = int_to_ptr.vmem [resolvable:$true] %s95
          %98 = dma.hbm_to_vmem [thread:$0]  %s93, 128, %s96, %s85
        $region20: #{tpu_custom_call.1} parent=15 // pred_fallthru
          _
      $region16: #{tpu_custom_call.1} parent=5 // pred_fallthru
        _
      %p99 = scmp.le.s32.totalorder 1, %s10
      %p100 = scmp.lt.s32.totalorder %s10, 3
      %p101 = pnand %p99, %p100
      %p102 = pneg %p101
      // Predicated region
      $region21: #{tpu_custom_call.1} parent=5 // pred_check
        _
      $region22: #{tpu_custom_call.1} parent=5 // pred_check_branch
        %104 = sbr.rel (%p101) target = $region24
      $region23: #{tpu_custom_call.1} parent=5 // pred_region
        %s105 = ssub.s32 %s10, 1
        %s106 = sand.u32 %s23, 1
        %s107 = scalar_lea.sflag [#allocation3], %s106
        %s108 = sand.u32 %s23, 1
        %s109 = smul.addr %s108, 8
        %s110 = scalar_lea.vmem [#allocation2], %s109
        // Predicated region
        $region25: #{tpu_custom_call.1} parent=23 // pred_check
          %p111 = pneg %p36
        $region26: #{tpu_custom_call.1} parent=23 // pred_check_branch
          %113 = sbr.rel (%p111) target = $region28
        $region27: #{tpu_custom_call.1} parent=23 // pred_region
          %114 = dma.done %s107, 128
        $region28: #{tpu_custom_call.1} parent=23 // pred_fallthru
          _
        %s115 = sand.u32 %s23, 1
        %s116 = scalar_lea.sflag [#allocation3], %s115
        %s117 = sand.u32 %s23, 1
        %s118 = smul.addr %s117, 8
        %s119 = scalar_lea.vmem [#allocation2], %s118
        %p120 = pneg %p36
        %p121 = pneg %p33
        %p122 = pneg %p62
        %p123 = pneg %p59
        %p124 = scmp.lt.s32.totalorder %s15, 1
        %s125 = scalar_select %p124, %s15, 1
        %s126 = smul.addr %s125, 8
        %s127 = scalar_lea.vmem %s1, %s126
        %p128 = scmp.lt.s32.totalorder %s15, 1
        %s129 = scalar_select %p128, %s15, 1
        %s130 = smul.addr %s129, 8
        %s131 = scalar_lea.vmem %s1, %s130
        %v132 = vld [vmem:[%s110] sm:$0xff]
        %v133 = vlaneseq
        %v134 = vshrl.u32 %v133, 7
        %v135 = vadd.s32 %v134, 8
        %v136 = vadd.s32 %v134, 16
        %v137 = vadd.s32 %v134, 24
        %v138 = vadd.s32 %v134, 32
        %v139 = vadd.s32 %v134, 40
        %v140 = vadd.s32 %v134, 48
        %v141 = vadd.s32 %v134, 56
        %v142 = vlaneseq
        %v143 = vand.u32 %v142, 127
        %v144 = vmul.u32 %v143, 10
        %vm145 = vcmp.ge.s32.totalorder %v134, %v144
        %vm146 = vcmp.ge.s32.totalorder %v135, %v144
        %vm147 = vcmp.ge.s32.totalorder %v136, %v144
        %vm148 = vcmp.ge.s32.totalorder %v137, %v144
        %vm149 = vcmp.ge.s32.totalorder %v138, %v144
        %vm150 = vcmp.ge.s32.totalorder %v139, %v144
        %vm151 = vcmp.ge.s32.totalorder %v140, %v144
        %vm152 = vcmp.ge.s32.totalorder %v141, %v144
        %v153 = vadd.s32 %v144, 10
        %vm154 = vcmp.lt.s32.totalorder %v134, %v153
        %vm155 = vcmp.lt.s32.totalorder %v135, %v153
        %vm156 = vcmp.lt.s32.totalorder %v136, %v153
        %vm157 = vcmp.lt.s32.totalorder %v137, %v153
        %vm158 = vcmp.lt.s32.totalorder %v138, %v153
        %vm159 = vcmp.lt.s32.totalorder %v139, %v153
        %vm160 = vcmp.lt.s32.totalorder %v140, %v153
        %vm161 = vcmp.lt.s32.totalorder %v141, %v153
        %vm162 = vmand %vm145, %vm154
        %vm163 = vmand %vm146, %vm155
        %vm164 = vmand %vm147, %vm156
        %vm165 = vmand %vm148, %vm157
        %vm166 = vmand %vm149, %vm158
        %vm167 = vmand %vm150, %vm159
        %vm168 = vmand %vm151, %vm160
        %vm169 = vmand %vm152, %vm161
        %v170 = vsel %vm162, 1.0, 0.0
        %v171 = vsel %vm163, 1.0, 0.0
        %v172 = vsel %vm164, 1.0, 0.0
        %v173 = vsel %vm165, 1.0, 0.0
        %v174 = vsel %vm166, 1.0, 0.0
        %v175 = vsel %vm167, 1.0, 0.0
        %v176 = vsel %vm168, 1.0, 0.0
        %v177 = vsel %vm169, 1.0, 0.0
        %vm178 = vcmask 523264
        %v179 = vsel %vm178, %v132, 0.0
        %180 = vadd.xlane.f32.xlu0 %v179
        %v181 = vpop.xlane.xlu0 %180
        %v182 = vrcp.pop 64.0
        %v183 = vmul.f32 %v181, %v182
        %v184 = vsub.f32 %v132, %v183
        %v186 = vsel %vm178, %v184, 0
        %188 = vmatprep.subr.mxu0 0.0
        %189 = vmatpush1.msra.mxu0 %v170
        %190 = vmatprep.subr.mxu0 0.0
        %191 = vmatpush1.msra.mxu0 %v171
        %192 = vmatprep.subr.mxu0 0.0
        %193 = vmatpush1.msra.mxu0 %v172
        %194 = vmatprep.subr.mxu0 0.0
        %195 = vmatpush1.msra.mxu0 %v173
        %196 = vmatprep.subr.mxu0 0.0
        %197 = vmatpush1.msra.mxu0 %v174
        %198 = vmatprep.subr.mxu0 0.0
        %199 = vmatpush1.msra.mxu0 %v175
        %200 = vmatprep.subr.mxu0 0.0
        %201 = vmatpush1.msra.mxu0 %v176
        %202 = vmatprep.subr.mxu0 0.0
        %203 = vmatpush1.msra.mxu0 %v177
        %204 = vmatprep.subr.mxu0 0.0
        %205 = vmatpush1.msra.mxu0 0.0
        %206 = vmatprep.subr.mxu0 0.0
        %207 = vmatpush1.msra.mxu0 0.0
        %208 = vmatprep.subr.mxu0 0.0
        %209 = vmatpush1.msra.mxu0 0.0
        %210 = vmatprep.subr.mxu0 0.0
        %211 = vmatpush1.msra.mxu0 0.0
        %212 = vmatprep.subr.mxu0 0.0
        %213 = vmatpush1.msra.mxu0 0.0
        %214 = vmatprep.subr.mxu0 0.0
        %215 = vmatpush1.msra.mxu0 0.0
        %216 = vmatprep.subr.mxu0 0.0
        %217 = vmatpush1.msra.mxu0 0.0
        %218 = vmatprep.subr.mxu0 0.0
        %219 = vmatpush1.msra.mxu0 0.0
        %220 = vmatprep.subr.mxu0 0.0
        %221 = vmatpush1.msra.mxu0 0.0
        %222 = vmatprep.subr.mxu0 0.0
        %223 = vmatpush1.msra.mxu0 0.0
        %224 = vmatprep.subr.mxu0 0.0
        %225 = vmatpush1.msra.mxu0 0.0
        %226 = vmatprep.subr.mxu0 0.0
        %227 = vmatpush1.msra.mxu0 0.0
        %228 = vmatprep.subr.mxu0 0.0
        %229 = vmatpush1.msra.mxu0 0.0
        %230 = vmatprep.subr.mxu0 0.0
        %231 = vmatpush1.msra.mxu0 0.0
        %232 = vmatprep.subr.mxu0 0.0
        %233 = vmatpush1.msra.mxu0 0.0
        %234 = vmatprep.subr.mxu0 0.0
        %235 = vmatpush1.msra.mxu0 0.0
        %236 = vmatprep.subr.mxu0 0.0
        %237 = vmatpush1.msra.mxu0 0.0
        %238 = vmatprep.subr.mxu0 0.0
        %239 = vmatpush1.msra.mxu0 0.0
        %240 = vmatprep.subr.mxu0 0.0
        %241 = vmatpush1.msra.mxu0 0.0
        %242 = vmatprep.subr.mxu0 0.0
        %243 = vmatpush1.msra.mxu0 0.0
        %244 = vmatprep.subr.mxu0 0.0
        %245 = vmatpush1.msra.mxu0 0.0
        %246 = vmatprep.subr.mxu0 0.0
        %247 = vmatpush1.msra.mxu0 0.0
        %248 = vmatprep.subr.mxu0 0.0
        %249 = vmatpush1.msra.mxu0 0.0
        %250 = vmatprep.subr.mxu0 0.0
        %251 = vmatpush1.msra.mxu0 0.0
        %252 = vmatprep.mubr.f32.mxu0 0.0
        %v253 = vand.u32 %v186, 4294901760
        %v254 = vsub.f32 %v186, %v253
        %v255 = vand.u32 %v254, 4294901760
        %v256 = vsub.f32 %v254, %v255
        %v257 = vand.u32 %v256, 4294901760
        %258 = vmatmul.mubr.f32.gmra.mrb[0].mxu0 %v257
        %v259 = vpop.f32.mrb[0].mxu0
        %v260 = vadd.f32 0.0, %v259
        %v261 = vpop.f32.mrb[0].mxu0
        %262 = vdwg.mxu0
        %263 = vmatprep.subr.mxu0 0.0
        %v264 = vsub.f32 %v170, %v170
        %v265 = vand.u32 %v264, 4294901760
        %v266 = vsub.f32 %v264, %v265
        %v267 = vand.u32 %v266, 4294901760
        %268 = vmatpush1.msra.mxu0 %v267
        %269 = vmatprep.subr.mxu0 0.0
        %v270 = vsub.f32 %v171, %v171
        %v271 = vand.u32 %v270, 4294901760
        %v272 = vsub.f32 %v270, %v271
        %v273 = vand.u32 %v272, 4294901760
        %274 = vmatpush1.msra.mxu0 %v273
        %275 = vmatprep.subr.mxu0 0.0
        %v276 = vsub.f32 %v172, %v172
        %v277 = vand.u32 %v276, 4294901760
        %v278 = vsub.f32 %v276, %v277
        %v279 = vand.u32 %v278, 4294901760
        %280 = vmatpush1.msra.mxu0 %v279
        %281 = vmatprep.subr.mxu0 0.0
        %v282 = vsub.f32 %v173, %v173
        %v283 = vand.u32 %v282, 4294901760
        %v284 = vsub.f32 %v282, %v283
        %v285 = vand.u32 %v284, 4294901760
        %286 = vmatpush1.msra.mxu0 %v285
        %287 = vmatprep.subr.mxu0 0.0
        %v288 = vsub.f32 %v174, %v174
        %v289 = vand.u32 %v288, 4294901760
        %v290 = vsub.f32 %v288, %v289
        %v291 = vand.u32 %v290, 4294901760
        %292 = vmatpush1.msra.mxu0 %v291
        %293 = vmatprep.subr.mxu0 0.0
        %v294 = vsub.f32 %v175, %v175
        %v295 = vand.u32 %v294, 4294901760
        %v296 = vsub.f32 %v294, %v295
        %v297 = vand.u32 %v296, 4294901760
        %298 = vmatpush1.msra.mxu0 %v297
        %299 = vmatprep.subr.mxu0 0.0
        %v300 = vsub.f32 %v176, %v176
        %v301 = vand.u32 %v300, 4294901760
        %v302 = vsub.f32 %v300, %v301
        %v303 = vand.u32 %v302, 4294901760
        %304 = vmatpush1.msra.mxu0 %v303
        %305 = vmatprep.subr.mxu0 0.0
        %v306 = vsub.f32 %v177, %v177
        %v307 = vand.u32 %v306, 4294901760
        %v308 = vsub.f32 %v306, %v307
        %v309 = vand.u32 %v308, 4294901760
        %310 = vmatpush1.msra.mxu0 %v309
        %311 = vmatprep.subr.mxu0 0.0
        %312 = vmatpush1.msra.mxu0 0.0
        %313 = vmatprep.subr.mxu0 0.0
        %314 = vmatpush1.msra.mxu0 0.0
        %315 = vmatprep.subr.mxu0 0.0
        %316 = vmatpush1.msra.mxu0 0.0
        %317 = vmatprep.subr.mxu0 0.0
        %318 = vmatpush1.msra.mxu0 0.0
        %319 = vmatprep.subr.mxu0 0.0
        %320 = vmatpush1.msra.mxu0 0.0
        %321 = vmatprep.subr.mxu0 0.0
        %322 = vmatpush1.msra.mxu0 0.0
        %323 = vmatprep.subr.mxu0 0.0
        %324 = vmatpush1.msra.mxu0 0.0
        %325 = vmatprep.subr.mxu0 0.0
        %326 = vmatpush1.msra.mxu0 0.0
        %327 = vmatprep.subr.mxu0 0.0
        %328 = vmatpush1.msra.mxu0 0.0
        %329 = vmatprep.subr.mxu0 0.0
        %330 = vmatpush1.msra.mxu0 0.0
        %331 = vmatprep.subr.mxu0 0.0
        %332 = vmatpush1.msra.mxu0 0.0
        %333 = vmatprep.subr.mxu0 0.0
        %334 = vmatpush1.msra.mxu0 0.0
        %335 = vmatprep.subr.mxu0 0.0
        %336 = vmatpush1.msra.mxu0 0.0
        %337 = vmatprep.subr.mxu0 0.0
        %338 = vmatpush1.msra.mxu0 0.0
        %339 = vmatprep.subr.mxu0 0.0
        %340 = vmatpush1.msra.mxu0 0.0
        %341 = vmatprep.subr.mxu0 0.0
        %342 = vmatpush1.msra.mxu0 0.0
        %343 = vmatprep.subr.mxu0 0.0
        %344 = vmatpush1.msra.mxu0 0.0
        %345 = vmatprep.subr.mxu0 0.0
        %346 = vmatpush1.msra.mxu0 0.0
        %347 = vmatprep.subr.mxu0 0.0
        %348 = vmatpush1.msra.mxu0 0.0
        %349 = vmatprep.subr.mxu0 0.0
        %350 = vmatpush1.msra.mxu0 0.0
        %351 = vmatprep.subr.mxu0 0.0
        %352 = vmatpush1.msra.mxu0 0.0
        %353 = vmatprep.subr.mxu0 0.0
        %354 = vmatpush1.msra.mxu0 0.0
        %355 = vmatprep.subr.mxu0 0.0
        %356 = vmatpush1.msra.mxu0 0.0
        %357 = vmatprep.subr.mxu0 0.0
        %358 = vmatpush1.msra.mxu0 0.0
        %359 = vmatprep.mubr.f32.mxu0 0.0
        %v360 = vand.u32 %v186, 4294901760
        %361 = vmatmul.mubr.f32.gmra.mrb[0].mxu0 %v360
        %v362 = vpop.f32.mrb[0].mxu0
        %v363 = vadd.f32 %v260, %v362
        %v364 = vpop.f32.mrb[0].mxu0
        %365 = vdwg.mxu0
        %366 = vmatprep.subr.mxu0 0.0
        %v367 = vsub.f32 %v170, %v170
        %368 = vmatpush1.msra.mxu0 %v367
        %369 = vmatprep.subr.mxu0 0.0
        %v370 = vsub.f32 %v171, %v171
        %371 = vmatpush1.msra.mxu0 %v370
        %372 = vmatprep.subr.mxu0 0.0
        %v373 = vsub.f32 %v172, %v172
        %374 = vmatpush1.msra.mxu0 %v373
        %375 = vmatprep.subr.mxu0 0.0
        %v376 = vsub.f32 %v173, %v173
        %377 = vmatpush1.msra.mxu0 %v376
        %378 = vmatprep.subr.mxu0 0.0
        %v379 = vsub.f32 %v174, %v174
        %380 = vmatpush1.msra.mxu0 %v379
        %381 = vmatprep.subr.mxu0 0.0
        %v382 = vsub.f32 %v175, %v175
        %383 = vmatpush1.msra.mxu0 %v382
        %384 = vmatprep.subr.mxu0 0.0
        %v385 = vsub.f32 %v176, %v176
        %386 = vmatpush1.msra.mxu0 %v385
        %387 = vmatprep.subr.mxu0 0.0
        %v388 = vsub.f32 %v177, %v177
        %389 = vmatpush1.msra.mxu0 %v388
        %390 = vmatprep.subr.mxu0 0.0
        %391 = vmatpush1.msra.mxu0 0.0
        %392 = vmatprep.subr.mxu0 0.0
        %393 = vmatpush1.msra.mxu0 0.0
        %394 = vmatprep.subr.mxu0 0.0
        %395 = vmatpush1.msra.mxu0 0.0
        %396 = vmatprep.subr.mxu0 0.0
        %397 = vmatpush1.msra.mxu0 0.0
        %398 = vmatprep.subr.mxu0 0.0
        %399 = vmatpush1.msra.mxu0 0.0
        %400 = vmatprep.subr.mxu0 0.0
        %401 = vmatpush1.msra.mxu0 0.0
        %402 = vmatprep.subr.mxu0 0.0
        %403 = vmatpush1.msra.mxu0 0.0
        %404 = vmatprep.subr.mxu0 0.0
        %405 = vmatpush1.msra.mxu0 0.0
        %406 = vmatprep.subr.mxu0 0.0
        %407 = vmatpush1.msra.mxu0 0.0
        %408 = vmatprep.subr.mxu0 0.0
        %409 = vmatpush1.msra.mxu0 0.0
        %410 = vmatprep.subr.mxu0 0.0
        %411 = vmatpush1.msra.mxu0 0.0
        %412 = vmatprep.subr.mxu0 0.0
        %413 = vmatpush1.msra.mxu0 0.0
        %414 = vmatprep.subr.mxu0 0.0
        %415 = vmatpush1.msra.mxu0 0.0
        %416 = vmatprep.subr.mxu0 0.0
        %417 = vmatpush1.msra.mxu0 0.0
        %418 = vmatprep.subr.mxu0 0.0
        %419 = vmatpush1.msra.mxu0 0.0
        %420 = vmatprep.subr.mxu0 0.0
        %421 = vmatpush1.msra.mxu0 0.0
        %422 = vmatprep.subr.mxu0 0.0
        %423 = vmatpush1.msra.mxu0 0.0
        %424 = vmatprep.subr.mxu0 0.0
        %425 = vmatpush1.msra.mxu0 0.0
        %426 = vmatprep.subr.mxu0 0.0
        %427 = vmatpush1.msra.mxu0 0.0
        %428 = vmatprep.subr.mxu0 0.0
        %429 = vmatpush1.msra.mxu0 0.0
        %430 = vmatprep.subr.mxu0 0.0
        %431 = vmatpush1.msra.mxu0 0.0
        %432 = vmatprep.subr.mxu0 0.0
        %433 = vmatpush1.msra.mxu0 0.0
        %434 = vmatprep.subr.mxu0 0.0
        %435 = vmatpush1.msra.mxu0 0.0
        %436 = vmatprep.subr.mxu0 0.0
        %437 = vmatpush1.msra.mxu0 0.0
        %438 = vmatprep.mubr.f32.mxu0 0.0
        %v439 = vand.u32 %v186, 4294901760
        %v440 = vsub.f32 %v186, %v439
        %441 = vmatmul.mubr.f32.gmra.mrb[0].mxu0 %v440
        %v442 = vpop.f32.mrb[0].mxu0
        %v443 = vadd.f32 %v363, %v442
        %v444 = vpop.f32.mrb[0].mxu0
        %445 = vdwg.mxu0
        %446 = vmatprep.subr.mxu0 0.0
        %447 = vmatpush1.msra.mxu0 %v170
        %448 = vmatprep.subr.mxu0 0.0
        %449 = vmatpush1.msra.mxu0 %v171
        %450 = vmatprep.subr.mxu0 0.0
        %451 = vmatpush1.msra.mxu0 %v172
        %452 = vmatprep.subr.mxu0 0.0
        %453 = vmatpush1.msra.mxu0 %v173
        %454 = vmatprep.subr.mxu0 0.0
        %455 = vmatpush1.msra.mxu0 %v174
        %456 = vmatprep.subr.mxu0 0.0
        %457 = vmatpush1.msra.mxu0 %v175
        %458 = vmatprep.subr.mxu0 0.0
        %459 = vmatpush1.msra.mxu0 %v176
        %460 = vmatprep.subr.mxu0 0.0
        %461 = vmatpush1.msra.mxu0 %v177
        %462 = vmatprep.subr.mxu0 0.0
        %463 = vmatpush1.msra.mxu0 0.0
        %464 = vmatprep.subr.mxu0 0.0
        %465 = vmatpush1.msra.mxu0 0.0
        %466 = vmatprep.subr.mxu0 0.0
        %467 = vmatpush1.msra.mxu0 0.0
        %468 = vmatprep.subr.mxu0 0.0
        %469 = vmatpush1.msra.mxu0 0.0
        %470 = vmatprep.subr.mxu0 0.0
        %471 = vmatpush1.msra.mxu0 0.0
        %472 = vmatprep.subr.mxu0 0.0
        %473 = vmatpush1.msra.mxu0 0.0
        %474 = vmatprep.subr.mxu0 0.0
        %475 = vmatpush1.msra.mxu0 0.0
        %476 = vmatprep.subr.mxu0 0.0
        %477 = vmatpush1.msra.mxu0 0.0
        %478 = vmatprep.subr.mxu0 0.0
        %479 = vmatpush1.msra.mxu0 0.0
        %480 = vmatprep.subr.mxu0 0.0
        %481 = vmatpush1.msra.mxu0 0.0
        %482 = vmatprep.subr.mxu0 0.0
        %483 = vmatpush1.msra.mxu0 0.0
        %484 = vmatprep.subr.mxu0 0.0
        %485 = vmatpush1.msra.mxu0 0.0
        %486 = vmatprep.subr.mxu0 0.0
        %487 = vmatpush1.msra.mxu0 0.0
        %488 = vmatprep.subr.mxu0 0.0
        %489 = vmatpush1.msra.mxu0 0.0
        %490 = vmatprep.subr.mxu0 0.0
        %491 = vmatpush1.msra.mxu0 0.0
        %492 = vmatprep.subr.mxu0 0.0
        %493 = vmatpush1.msra.mxu0 0.0
        %494 = vmatprep.subr.mxu0 0.0
        %495 = vmatpush1.msra.mxu0 0.0
        %496 = vmatprep.subr.mxu0 0.0
        %497 = vmatpush1.msra.mxu0 0.0
        %498 = vmatprep.subr.mxu0 0.0
        %499 = vmatpush1.msra.mxu0 0.0
        %500 = vmatprep.subr.mxu0 0.0
        %501 = vmatpush1.msra.mxu0 0.0
        %502 = vmatprep.subr.mxu0 0.0
        %503 = vmatpush1.msra.mxu0 0.0
        %504 = vmatprep.subr.mxu0 0.0
        %505 = vmatpush1.msra.mxu0 0.0
        %506 = vmatprep.subr.mxu0 0.0
        %507 = vmatpush1.msra.mxu0 0.0
        %508 = vmatprep.subr.mxu0 0.0
        %509 = vmatpush1.msra.mxu0 0.0
        %510 = vmatprep.mubr.f32.mxu0 0.0
        %v511 = vand.u32 %v186, 4294901760
        %v512 = vsub.f32 %v186, %v511
        %v513 = vand.u32 %v512, 4294901760
        %514 = vmatmul.mubr.f32.gmra.mrb[0].mxu0 %v513
        %v515 = vpop.f32.mrb[0].mxu0
        %v516 = vadd.f32 %v443, %v515
        %v517 = vpop.f32.mrb[0].mxu0
        %518 = vdwg.mxu0
        %519 = vmatprep.subr.mxu0 0.0
        %v520 = vsub.f32 %v170, %v170
        %v521 = vand.u32 %v520, 4294901760
        %522 = vmatpush1.msra.mxu0 %v521
        %523 = vmatprep.subr.mxu0 0.0
        %v524 = vsub.f32 %v171, %v171
        %v525 = vand.u32 %v524, 4294901760
        %526 = vmatpush1.msra.mxu0 %v525
        %527 = vmatprep.subr.mxu0 0.0
        %v528 = vsub.f32 %v172, %v172
        %v529 = vand.u32 %v528, 4294901760
        %530 = vmatpush1.msra.mxu0 %v529
        %531 = vmatprep.subr.mxu0 0.0
        %v532 = vsub.f32 %v173, %v173
        %v533 = vand.u32 %v532, 4294901760
        %534 = vmatpush1.msra.mxu0 %v533
        %535 = vmatprep.subr.mxu0 0.0
        %v536 = vsub.f32 %v174, %v174
        %v537 = vand.u32 %v536, 4294901760
        %538 = vmatpush1.msra.mxu0 %v537
        %539 = vmatprep.subr.mxu0 0.0
        %v540 = vsub.f32 %v175, %v175
        %v541 = vand.u32 %v540, 4294901760
        %542 = vmatpush1.msra.mxu0 %v541
        %543 = vmatprep.subr.mxu0 0.0
        %v544 = vsub.f32 %v176, %v176
        %v545 = vand.u32 %v544, 4294901760
        %546 = vmatpush1.msra.mxu0 %v545
        %547 = vmatprep.subr.mxu0 0.0
        %v548 = vsub.f32 %v177, %v177
        %v549 = vand.u32 %v548, 4294901760
        %550 = vmatpush1.msra.mxu0 %v549
        %551 = vmatprep.subr.mxu0 0.0
        %552 = vmatpush1.msra.mxu0 0.0
        %553 = vmatprep.subr.mxu0 0.0
        %554 = vmatpush1.msra.mxu0 0.0
        %555 = vmatprep.subr.mxu0 0.0
        %556 = vmatpush1.msra.mxu0 0.0
        %557 = vmatprep.subr.mxu0 0.0
        %558 = vmatpush1.msra.mxu0 0.0
        %559 = vmatprep.subr.mxu0 0.0
        %560 = vmatpush1.msra.mxu0 0.0
        %561 = vmatprep.subr.mxu0 0.0
        %562 = vmatpush1.msra.mxu0 0.0
        %563 = vmatprep.subr.mxu0 0.0
        %564 = vmatpush1.msra.mxu0 0.0
        %565 = vmatprep.subr.mxu0 0.0
        %566 = vmatpush1.msra.mxu0 0.0
        %567 = vmatprep.subr.mxu0 0.0
        %568 = vmatpush1.msra.mxu0 0.0
        %569 = vmatprep.subr.mxu0 0.0
        %570 = vmatpush1.msra.mxu0 0.0
        %571 = vmatprep.subr.mxu0 0.0
        %572 = vmatpush1.msra.mxu0 0.0
        %573 = vmatprep.subr.mxu0 0.0
        %574 = vmatpush1.msra.mxu0 0.0
        %575 = vmatprep.subr.mxu0 0.0
        %576 = vmatpush1.msra.mxu0 0.0
        %577 = vmatprep.subr.mxu0 0.0
        %578 = vmatpush1.msra.mxu0 0.0
        %579 = vmatprep.subr.mxu0 0.0
        %580 = vmatpush1.msra.mxu0 0.0
        %581 = vmatprep.subr.mxu0 0.0
        %582 = vmatpush1.msra.mxu0 0.0
        %583 = vmatprep.subr.mxu0 0.0
        %584 = vmatpush1.msra.mxu0 0.0
        %585 = vmatprep.subr.mxu0 0.0
        %586 = vmatpush1.msra.mxu0 0.0
        %587 = vmatprep.subr.mxu0 0.0
        %588 = vmatpush1.msra.mxu0 0.0
        %589 = vmatprep.subr.mxu0 0.0
        %590 = vmatpush1.msra.mxu0 0.0
        %591 = vmatprep.subr.mxu0 0.0
        %592 = vmatpush1.msra.mxu0 0.0
        %593 = vmatprep.subr.mxu0 0.0
        %594 = vmatpush1.msra.mxu0 0.0
        %595 = vmatprep.subr.mxu0 0.0
        %596 = vmatpush1.msra.mxu0 0.0
        %597 = vmatprep.subr.mxu0 0.0
        %598 = vmatpush1.msra.mxu0 0.0
        %599 = vmatprep.mubr.f32.mxu0 0.0
        %v600 = vand.u32 %v186, 4294901760
        %601 = vmatmul.mubr.f32.gmra.mrb[0].mxu0 %v600
        %v602 = vpop.f32.mrb[0].mxu0
        %v603 = vadd.f32 %v516, %v602
        %v604 = vpop.f32.mrb[0].mxu0
        %605 = vdwg.mxu0
        %606 = vmatprep.subr.mxu0 0.0
        %607 = vmatpush1.msra.mxu0 %v170
        %608 = vmatprep.subr.mxu0 0.0
        %609 = vmatpush1.msra.mxu0 %v171
        %610 = vmatprep.subr.mxu0 0.0
        %611 = vmatpush1.msra.mxu0 %v172
        %612 = vmatprep.subr.mxu0 0.0
        %613 = vmatpush1.msra.mxu0 %v173
        %614 = vmatprep.subr.mxu0 0.0
        %615 = vmatpush1.msra.mxu0 %v174
        %616 = vmatprep.subr.mxu0 0.0
        %617 = vmatpush1.msra.mxu0 %v175
        %618 = vmatprep.subr.mxu0 0.0
        %619 = vmatpush1.msra.mxu0 %v176
        %620 = vmatprep.subr.mxu0 0.0
        %621 = vmatpush1.msra.mxu0 %v177
        %622 = vmatprep.subr.mxu0 0.0
        %623 = vmatpush1.msra.mxu0 0.0
        %624 = vmatprep.subr.mxu0 0.0
        %625 = vmatpush1.msra.mxu0 0.0
        %626 = vmatprep.subr.mxu0 0.0
        %627 = vmatpush1.msra.mxu0 0.0
        %628 = vmatprep.subr.mxu0 0.0
        %629 = vmatpush1.msra.mxu0 0.0
        %630 = vmatprep.subr.mxu0 0.0
        %631 = vmatpush1.msra.mxu0 0.0
        %632 = vmatprep.subr.mxu0 0.0
        %633 = vmatpush1.msra.mxu0 0.0
        %634 = vmatprep.subr.mxu0 0.0
        %635 = vmatpush1.msra.mxu0 0.0
        %636 = vmatprep.subr.mxu0 0.0
        %637 = vmatpush1.msra.mxu0 0.0
        %638 = vmatprep.subr.mxu0 0.0
        %639 = vmatpush1.msra.mxu0 0.0
        %640 = vmatprep.subr.mxu0 0.0
        %641 = vmatpush1.msra.mxu0 0.0
        %642 = vmatprep.subr.mxu0 0.0
        %643 = vmatpush1.msra.mxu0 0.0
        %644 = vmatprep.subr.mxu0 0.0
        %645 = vmatpush1.msra.mxu0 0.0
        %646 = vmatprep.subr.mxu0 0.0
        %647 = vmatpush1.msra.mxu0 0.0
        %648 = vmatprep.subr.mxu0 0.0
        %649 = vmatpush1.msra.mxu0 0.0
        %650 = vmatprep.subr.mxu0 0.0
        %651 = vmatpush1.msra.mxu0 0.0
        %652 = vmatprep.subr.mxu0 0.0
        %653 = vmatpush1.msra.mxu0 0.0
        %654 = vmatprep.subr.mxu0 0.0
        %655 = vmatpush1.msra.mxu0 0.0
        %656 = vmatprep.subr.mxu0 0.0
        %657 = vmatpush1.msra.mxu0 0.0
        %658 = vmatprep.subr.mxu0 0.0
        %659 = vmatpush1.msra.mxu0 0.0
        %660 = vmatprep.subr.mxu0 0.0
        %661 = vmatpush1.msra.mxu0 0.0
        %662 = vmatprep.subr.mxu0 0.0
        %663 = vmatpush1.msra.mxu0 0.0
        %664 = vmatprep.subr.mxu0 0.0
        %665 = vmatpush1.msra.mxu0 0.0
        %666 = vmatprep.subr.mxu0 0.0
        %667 = vmatpush1.msra.mxu0 0.0
        %668 = vmatprep.subr.mxu0 0.0
        %669 = vmatpush1.msra.mxu0 0.0
        %670 = vmatprep.mubr.f32.mxu0 0.0
        %v671 = vand.u32 %v186, 4294901760
        %672 = vmatmul.mubr.f32.gmra.mrb[0].mxu0 %v671
        %v673 = vpop.f32.mrb[0].mxu0
        %v674 = vadd.f32 %v603, %v673
        %v675 = vpop.f32.mrb[0].mxu0
        %676 = vdwg.mxu0
        %v677 = vmul.f32 %v184, %v184
        %v679 = vsel %vm178, %v677, 0
        %681 = vmatprep.subr.mxu0 0.0
        %682 = vmatpush1.msra.mxu0 %v170
        %683 = vmatprep.subr.mxu0 0.0
        %684 = vmatpush1.msra.mxu0 %v171
        %685 = vmatprep.subr.mxu0 0.0
        %686 = vmatpush1.msra.mxu0 %v172
        %687 = vmatprep.subr.mxu0 0.0
        %688 = vmatpush1.msra.mxu0 %v173
        %689 = vmatprep.subr.mxu0 0.0
        %690 = vmatpush1.msra.mxu0 %v174
        %691 = vmatprep.subr.mxu0 0.0
        %692 = vmatpush1.msra.mxu0 %v175
        %693 = vmatprep.subr.mxu0 0.0
        %694 = vmatpush1.msra.mxu0 %v176
        %695 = vmatprep.subr.mxu0 0.0
        %696 = vmatpush1.msra.mxu0 %v177
        %697 = vmatprep.subr.mxu0 0.0
        %698 = vmatpush1.msra.mxu0 0.0
        %699 = vmatprep.subr.mxu0 0.0
        %700 = vmatpush1.msra.mxu0 0.0
        %701 = vmatprep.subr.mxu0 0.0
        %702 = vmatpush1.msra.mxu0 0.0
        %703 = vmatprep.subr.mxu0 0.0
        %704 = vmatpush1.msra.mxu0 0.0
        %705 = vmatprep.subr.mxu0 0.0
        %706 = vmatpush1.msra.mxu0 0.0
        %707 = vmatprep.subr.mxu0 0.0
        %708 = vmatpush1.msra.mxu0 0.0
        %709 = vmatprep.subr.mxu0 0.0
        %710 = vmatpush1.msra.mxu0 0.0
        %711 = vmatprep.subr.mxu0 0.0
        %712 = vmatpush1.msra.mxu0 0.0
        %713 = vmatprep.subr.mxu0 0.0
        %714 = vmatpush1.msra.mxu0 0.0
        %715 = vmatprep.subr.mxu0 0.0
        %716 = vmatpush1.msra.mxu0 0.0
        %717 = vmatprep.subr.mxu0 0.0
        %718 = vmatpush1.msra.mxu0 0.0
        %719 = vmatprep.subr.mxu0 0.0
        %720 = vmatpush1.msra.mxu0 0.0
        %721 = vmatprep.subr.mxu0 0.0
        %722 = vmatpush1.msra.mxu0 0.0
        %723 = vmatprep.subr.mxu0 0.0
        %724 = vmatpush1.msra.mxu0 0.0
        %725 = vmatprep.subr.mxu0 0.0
        %726 = vmatpush1.msra.mxu0 0.0
        %727 = vmatprep.subr.mxu0 0.0
        %728 = vmatpush1.msra.mxu0 0.0
        %729 = vmatprep.subr.mxu0 0.0
        %730 = vmatpush1.msra.mxu0 0.0
        %731 = vmatprep.subr.mxu0 0.0
        %732 = vmatpush1.msra.mxu0 0.0
        %733 = vmatprep.subr.mxu0 0.0
        %734 = vmatpush1.msra.mxu0 0.0
        %735 = vmatprep.subr.mxu0 0.0
        %736 = vmatpush1.msra.mxu0 0.0
        %737 = vmatprep.subr.mxu0 0.0
        %738 = vmatpush1.msra.mxu0 0.0
        %739 = vmatprep.subr.mxu0 0.0
        %740 = vmatpush1.msra.mxu0 0.0
        %741 = vmatprep.subr.mxu0 0.0
        %742 = vmatpush1.msra.mxu0 0.0
        %743 = vmatprep.subr.mxu0 0.0
        %744 = vmatpush1.msra.mxu0 0.0
        %745 = vmatprep.mubr.f32.mxu0 0.0
        %v746 = vand.u32 %v679, 4294901760
        %v747 = vsub.f32 %v679, %v746
        %v748 = vand.u32 %v747, 4294901760
        %v749 = vsub.f32 %v747, %v748
        %v750 = vand.u32 %v749, 4294901760
        %751 = vmatmul.mubr.f32.gmra.mrb[0].mxu0 %v750
        %v752 = vpop.f32.mrb[0].mxu0
        %v753 = vadd.f32 0.0, %v752
        %v754 = vpop.f32.mrb[0].mxu0
        %755 = vdwg.mxu0
        %756 = vmatprep.subr.mxu0 0.0
        %v757 = vsub.f32 %v170, %v170
        %v758 = vand.u32 %v757, 4294901760
        %v759 = vsub.f32 %v757, %v758
        %v760 = vand.u32 %v759, 4294901760
        %761 = vmatpush1.msra.mxu0 %v760
        %762 = vmatprep.subr.mxu0 0.0
        %v763 = vsub.f32 %v171, %v171
        %v764 = vand.u32 %v763, 4294901760
        %v765 = vsub.f32 %v763, %v764
        %v766 = vand.u32 %v765, 4294901760
        %767 = vmatpush1.msra.mxu0 %v766
        %768 = vmatprep.subr.mxu0 0.0
        %v769 = vsub.f32 %v172, %v172
        %v770 = vand.u32 %v769, 4294901760
        %v771 = vsub.f32 %v769, %v770
        %v772 = vand.u32 %v771, 4294901760
        %773 = vmatpush1.msra.mxu0 %v772
        %774 = vmatprep.subr.mxu0 0.0
        %v775 = vsub.f32 %v173, %v173
        %v776 = vand.u32 %v775, 4294901760
        %v777 = vsub.f32 %v775, %v776
        %v778 = vand.u32 %v777, 4294901760
        %779 = vmatpush1.msra.mxu0 %v778
        %780 = vmatprep.subr.mxu0 0.0
        %v781 = vsub.f32 %v174, %v174
        %v782 = vand.u32 %v781, 4294901760
        %v783 = vsub.f32 %v781, %v782
        %v784 = vand.u32 %v783, 4294901760
        %785 = vmatpush1.msra.mxu0 %v784
        %786 = vmatprep.subr.mxu0 0.0
        %v787 = vsub.f32 %v175, %v175
        %v788 = vand.u32 %v787, 4294901760
        %v789 = vsub.f32 %v787, %v788
        %v790 = vand.u32 %v789, 4294901760
        %791 = vmatpush1.msra.mxu0 %v790
        %792 = vmatprep.subr.mxu0 0.0
        %v793 = vsub.f32 %v176, %v176
        %v794 = vand.u32 %v793, 4294901760
        %v795 = vsub.f32 %v793, %v794
        %v796 = vand.u32 %v795, 4294901760
        %797 = vmatpush1.msra.mxu0 %v796
        %798 = vmatprep.subr.mxu0 0.0
        %v799 = vsub.f32 %v177, %v177
        %v800 = vand.u32 %v799, 4294901760
        %v801 = vsub.f32 %v799, %v800
        %v802 = vand.u32 %v801, 4294901760
        %803 = vmatpush1.msra.mxu0 %v802
        %804 = vmatprep.subr.mxu0 0.0
        %805 = vmatpush1.msra.mxu0 0.0
        %806 = vmatprep.subr.mxu0 0.0
        %807 = vmatpush1.msra.mxu0 0.0
        %808 = vmatprep.subr.mxu0 0.0
        %809 = vmatpush1.msra.mxu0 0.0
        %810 = vmatprep.subr.mxu0 0.0
        %811 = vmatpush1.msra.mxu0 0.0
        %812 = vmatprep.subr.mxu0 0.0
        %813 = vmatpush1.msra.mxu0 0.0
        %814 = vmatprep.subr.mxu0 0.0
        %815 = vmatpush1.msra.mxu0 0.0
        %816 = vmatprep.subr.mxu0 0.0
        %817 = vmatpush1.msra.mxu0 0.0
        %818 = vmatprep.subr.mxu0 0.0
        %819 = vmatpush1.msra.mxu0 0.0
        %820 = vmatprep.subr.mxu0 0.0
        %821 = vmatpush1.msra.mxu0 0.0
        %822 = vmatprep.subr.mxu0 0.0
        %823 = vmatpush1.msra.mxu0 0.0
        %824 = vmatprep.subr.mxu0 0.0
        %825 = vmatpush1.msra.mxu0 0.0
        %826 = vmatprep.subr.mxu0 0.0
        %827 = vmatpush1.msra.mxu0 0.0
        %828 = vmatprep.subr.mxu0 0.0
        %829 = vmatpush1.msra.mxu0 0.0
        %830 = vmatprep.subr.mxu0 0.0
        %831 = vmatpush1.msra.mxu0 0.0
        %832 = vmatprep.subr.mxu0 0.0
        %833 = vmatpush1.msra.mxu0 0.0
        %834 = vmatprep.subr.mxu0 0.0
        %835 = vmatpush1.msra.mxu0 0.0
        %836 = vmatprep.subr.mxu0 0.0
        %837 = vmatpush1.msra.mxu0 0.0
        %838 = vmatprep.subr.mxu0 0.0
        %839 = vmatpush1.msra.mxu0 0.0
        %840 = vmatprep.subr.mxu0 0.0
        %841 = vmatpush1.msra.mxu0 0.0
        %842 = vmatprep.subr.mxu0 0.0
        %843 = vmatpush1.msra.mxu0 0.0
        %844 = vmatprep.subr.mxu0 0.0
        %845 = vmatpush1.msra.mxu0 0.0
        %846 = vmatprep.subr.mxu0 0.0
        %847 = vmatpush1.msra.mxu0 0.0
        %848 = vmatprep.subr.mxu0 0.0
        %849 = vmatpush1.msra.mxu0 0.0
        %850 = vmatprep.subr.mxu0 0.0
        %851 = vmatpush1.msra.mxu0 0.0
        %852 = vmatprep.mubr.f32.mxu0 0.0
        %v853 = vand.u32 %v679, 4294901760
        %854 = vmatmul.mubr.f32.gmra.mrb[0].mxu0 %v853
        %v855 = vpop.f32.mrb[0].mxu0
        %v856 = vadd.f32 %v753, %v855
        %v857 = vpop.f32.mrb[0].mxu0
        %858 = vdwg.mxu0
        %859 = vmatprep.subr.mxu0 0.0
        %v860 = vsub.f32 %v170, %v170
        %861 = vmatpush1.msra.mxu0 %v860
        %862 = vmatprep.subr.mxu0 0.0
        %v863 = vsub.f32 %v171, %v171
        %864 = vmatpush1.msra.mxu0 %v863
        %865 = vmatprep.subr.mxu0 0.0
        %v866 = vsub.f32 %v172, %v172
        %867 = vmatpush1.msra.mxu0 %v866
        %868 = vmatprep.subr.mxu0 0.0
        %v869 = vsub.f32 %v173, %v173
        %870 = vmatpush1.msra.mxu0 %v869
        %871 = vmatprep.subr.mxu0 0.0
        %v872 = vsub.f32 %v174, %v174
        %873 = vmatpush1.msra.mxu0 %v872
        %874 = vmatprep.subr.mxu0 0.0
        %v875 = vsub.f32 %v175, %v175
        %876 = vmatpush1.msra.mxu0 %v875
        %877 = vmatprep.subr.mxu0 0.0
        %v878 = vsub.f32 %v176, %v176
        %879 = vmatpush1.msra.mxu0 %v878
        %880 = vmatprep.subr.mxu0 0.0
        %v881 = vsub.f32 %v177, %v177
        %882 = vmatpush1.msra.mxu0 %v881
        %883 = vmatprep.subr.mxu0 0.0
        %884 = vmatpush1.msra.mxu0 0.0
        %885 = vmatprep.subr.mxu0 0.0
        %886 = vmatpush1.msra.mxu0 0.0
        %887 = vmatprep.subr.mxu0 0.0
        %888 = vmatpush1.msra.mxu0 0.0
        %889 = vmatprep.subr.mxu0 0.0
        %890 = vmatpush1.msra.mxu0 0.0
        %891 = vmatprep.subr.mxu0 0.0
        %892 = vmatpush1.msra.mxu0 0.0
        %893 = vmatprep.subr.mxu0 0.0
        %894 = vmatpush1.msra.mxu0 0.0
        %895 = vmatprep.subr.mxu0 0.0
        %896 = vmatpush1.msra.mxu0 0.0
        %897 = vmatprep.subr.mxu0 0.0
        %898 = vmatpush1.msra.mxu0 0.0
        %899 = vmatprep.subr.mxu0 0.0
        %900 = vmatpush1.msra.mxu0 0.0
        %901 = vmatprep.subr.mxu0 0.0
        %902 = vmatpush1.msra.mxu0 0.0
        %903 = vmatprep.subr.mxu0 0.0
        %904 = vmatpush1.msra.mxu0 0.0
        %905 = vmatprep.subr.mxu0 0.0
        %906 = vmatpush1.msra.mxu0 0.0
        %907 = vmatprep.subr.mxu0 0.0
        %908 = vmatpush1.msra.mxu0 0.0
        %909 = vmatprep.subr.mxu0 0.0
        %910 = vmatpush1.msra.mxu0 0.0
        %911 = vmatprep.subr.mxu0 0.0
        %912 = vmatpush1.msra.mxu0 0.0
        %913 = vmatprep.subr.mxu0 0.0
        %914 = vmatpush1.msra.mxu0 0.0
        %915 = vmatprep.subr.mxu0 0.0
        %916 = vmatpush1.msra.mxu0 0.0
        %917 = vmatprep.subr.mxu0 0.0
        %918 = vmatpush1.msra.mxu0 0.0
        %919 = vmatprep.subr.mxu0 0.0
        %920 = vmatpush1.msra.mxu0 0.0
        %921 = vmatprep.subr.mxu0 0.0
        %922 = vmatpush1.msra.mxu0 0.0
        %923 = vmatprep.subr.mxu0 0.0
        %924 = vmatpush1.msra.mxu0 0.0
        %925 = vmatprep.subr.mxu0 0.0
        %926 = vmatpush1.msra.mxu0 0.0
        %927 = vmatprep.subr.mxu0 0.0
        %928 = vmatpush1.msra.mxu0 0.0
        %929 = vmatprep.subr.mxu0 0.0
        %930 = vmatpush1.msra.mxu0 0.0
        %931 = vmatprep.mubr.f32.mxu0 0.0
        %v932 = vand.u32 %v679, 4294901760
        %v933 = vsub.f32 %v679, %v932
        %934 = vmatmul.mubr.f32.gmra.mrb[0].mxu0 %v933
        %v935 = vpop.f32.mrb[0].mxu0
        %v936 = vadd.f32 %v856, %v935
        %v937 = vpop.f32.mrb[0].mxu0
        %938 = vdwg.mxu0
        %939 = vmatprep.subr.mxu0 0.0
        %940 = vmatpush1.msra.mxu0 %v170
        %941 = vmatprep.subr.mxu0 0.0
        %942 = vmatpush1.msra.mxu0 %v171
        %943 = vmatprep.subr.mxu0 0.0
        %944 = vmatpush1.msra.mxu0 %v172
        %945 = vmatprep.subr.mxu0 0.0
        %946 = vmatpush1.msra.mxu0 %v173
        %947 = vmatprep.subr.mxu0 0.0
        %948 = vmatpush1.msra.mxu0 %v174
        %949 = vmatprep.subr.mxu0 0.0
        %950 = vmatpush1.msra.mxu0 %v175
        %951 = vmatprep.subr.mxu0 0.0
        %952 = vmatpush1.msra.mxu0 %v176
        %953 = vmatprep.subr.mxu0 0.0
        %954 = vmatpush1.msra.mxu0 %v177
        %955 = vmatprep.subr.mxu0 0.0
        %956 = vmatpush1.msra.mxu0 0.0
        %957 = vmatprep.subr.mxu0 0.0
        %958 = vmatpush1.msra.mxu0 0.0
        %959 = vmatprep.subr.mxu0 0.0
        %960 = vmatpush1.msra.mxu0 0.0
        %961 = vmatprep.subr.mxu0 0.0
        %962 = vmatpush1.msra.mxu0 0.0
        %963 = vmatprep.subr.mxu0 0.0
        %964 = vmatpush1.msra.mxu0 0.0
        %965 = vmatprep.subr.mxu0 0.0
        %966 = vmatpush1.msra.mxu0 0.0
        %967 = vmatprep.subr.mxu0 0.0
        %968 = vmatpush1.msra.mxu0 0.0
        %969 = vmatprep.subr.mxu0 0.0
        %970 = vmatpush1.msra.mxu0 0.0
        %971 = vmatprep.subr.mxu0 0.0
        %972 = vmatpush1.msra.mxu0 0.0
        %973 = vmatprep.subr.mxu0 0.0
        %974 = vmatpush1.msra.mxu0 0.0
        %975 = vmatprep.subr.mxu0 0.0
        %976 = vmatpush1.msra.mxu0 0.0
        %977 = vmatprep.subr.mxu0 0.0
        %978 = vmatpush1.msra.mxu0 0.0
        %979 = vmatprep.subr.mxu0 0.0
        %980 = vmatpush1.msra.mxu0 0.0
        %981 = vmatprep.subr.mxu0 0.0
        %982 = vmatpush1.msra.mxu0 0.0
        %983 = vmatprep.subr.mxu0 0.0
        %984 = vmatpush1.msra.mxu0 0.0
        %985 = vmatprep.subr.mxu0 0.0
        %986 = vmatpush1.msra.mxu0 0.0
        %987 = vmatprep.subr.mxu0 0.0
        %988 = vmatpush1.msra.mxu0 0.0
        %989 = vmatprep.subr.mxu0 0.0
        %990 = vmatpush1.msra.mxu0 0.0
        %991 = vmatprep.subr.mxu0 0.0
        %992 = vmatpush1.msra.mxu0 0.0
        %993 = vmatprep.subr.mxu0 0.0
        %994 = vmatpush1.msra.mxu0 0.0
        %995 = vmatprep.subr.mxu0 0.0
        %996 = vmatpush1.msra.mxu0 0.0
        %997 = vmatprep.subr.mxu0 0.0
        %998 = vmatpush1.msra.mxu0 0.0
        %999 = vmatprep.subr.mxu0 0.0
        %1000 = vmatpush1.msra.mxu0 0.0
        %1001 = vmatprep.subr.mxu0 0.0
        %1002 = vmatpush1.msra.mxu0 0.0
        %1003 = vmatprep.mubr.f32.mxu0 0.0
        %v1004 = vand.u32 %v679, 4294901760
        %v1005 = vsub.f32 %v679, %v1004
        %v1006 = vand.u32 %v1005, 4294901760
        %1007 = vmatmul.mubr.f32.gmra.mrb[0].mxu0 %v1006
        %v1008 = vpop.f32.mrb[0].mxu0
        %v1009 = vadd.f32 %v936, %v1008
        %v1010 = vpop.f32.mrb[0].mxu0
        %1011 = vdwg.mxu0
        %1012 = vmatprep.subr.mxu0 0.0
        %v1013 = vsub.f32 %v170, %v170
        %v1014 = vand.u32 %v1013, 4294901760
        %1015 = vmatpush1.msra.mxu0 %v1014
        %1016 = vmatprep.subr.mxu0 0.0
        %v1017 = vsub.f32 %v171, %v171
        %v1018 = vand.u32 %v1017, 4294901760
        %1019 = vmatpush1.msra.mxu0 %v1018
        %1020 = vmatprep.subr.mxu0 0.0
        %v1021 = vsub.f32 %v172, %v172
        %v1022 = vand.u32 %v1021, 4294901760
        %1023 = vmatpush1.msra.mxu0 %v1022
        %1024 = vmatprep.subr.mxu0 0.0
        %v1025 = vsub.f32 %v173, %v173
        %v1026 = vand.u32 %v1025, 4294901760
        %1027 = vmatpush1.msra.mxu0 %v1026
        %1028 = vmatprep.subr.mxu0 0.0
        %v1029 = vsub.f32 %v174, %v174
        %v1030 = vand.u32 %v1029, 4294901760
        %1031 = vmatpush1.msra.mxu0 %v1030
        %1032 = vmatprep.subr.mxu0 0.0
        %v1033 = vsub.f32 %v175, %v175
        %v1034 = vand.u32 %v1033, 4294901760
        %1035 = vmatpush1.msra.mxu0 %v1034
        %1036 = vmatprep.subr.mxu0 0.0
        %v1037 = vsub.f32 %v176, %v176
        %v1038 = vand.u32 %v1037, 4294901760
        %1039 = vmatpush1.msra.mxu0 %v1038
        %1040 = vmatprep.subr.mxu0 0.0
        %v1041 = vsub.f32 %v177, %v177
        %v1042 = vand.u32 %v1041, 4294901760
        %1043 = vmatpush1.msra.mxu0 %v1042
        %1044 = vmatprep.subr.mxu0 0.0
        %1045 = vmatpush1.msra.mxu0 0.0
        %1046 = vmatprep.subr.mxu0 0.0
        %1047 = vmatpush1.msra.mxu0 0.0
        %1048 = vmatprep.subr.mxu0 0.0
        %1049 = vmatpush1.msra.mxu0 0.0
        %1050 = vmatprep.subr.mxu0 0.0
        %1051 = vmatpush1.msra.mxu0 0.0
        %1052 = vmatprep.subr.mxu0 0.0
        %1053 = vmatpush1.msra.mxu0 0.0
        %1054 = vmatprep.subr.mxu0 0.0
        %1055 = vmatpush1.msra.mxu0 0.0
        %1056 = vmatprep.subr.mxu0 0.0
        %1057 = vmatpush1.msra.mxu0 0.0
        %1058 = vmatprep.subr.mxu0 0.0
        %1059 = vmatpush1.msra.mxu0 0.0
        %1060 = vmatprep.subr.mxu0 0.0
        %1061 = vmatpush1.msra.mxu0 0.0
        %1062 = vmatprep.subr.mxu0 0.0
        %1063 = vmatpush1.msra.mxu0 0.0
        %1064 = vmatprep.subr.mxu0 0.0
        %1065 = vmatpush1.msra.mxu0 0.0
        %1066 = vmatprep.subr.mxu0 0.0
        %1067 = vmatpush1.msra.mxu0 0.0
        %1068 = vmatprep.subr.mxu0 0.0
        %1069 = vmatpush1.msra.mxu0 0.0
        %1070 = vmatprep.subr.mxu0 0.0
        %1071 = vmatpush1.msra.mxu0 0.0
        %1072 = vmatprep.subr.mxu0 0.0
        %1073 = vmatpush1.msra.mxu0 0.0
        %1074 = vmatprep.subr.mxu0 0.0
        %1075 = vmatpush1.msra.mxu0 0.0
        %1076 = vmatprep.subr.mxu0 0.0
        %1077 = vmatpush1.msra.mxu0 0.0
        %1078 = vmatprep.subr.mxu0 0.0
        %1079 = vmatpush1.msra.mxu0 0.0
        %1080 = vmatprep.subr.mxu0 0.0
        %1081 = vmatpush1.msra.mxu0 0.0
        %1082 = vmatprep.subr.mxu0 0.0
        %1083 = vmatpush1.msra.mxu0 0.0
        %1084 = vmatprep.subr.mxu0 0.0
        %1085 = vmatpush1.msra.mxu0 0.0
        %1086 = vmatprep.subr.mxu0 0.0
        %1087 = vmatpush1.msra.mxu0 0.0
        %1088 = vmatprep.subr.mxu0 0.0
        %1089 = vmatpush1.msra.mxu0 0.0
        %1090 = vmatprep.subr.mxu0 0.0
        %1091 = vmatpush1.msra.mxu0 0.0
        %1092 = vmatprep.mubr.f32.mxu0 0.0
        %v1093 = vand.u32 %v679, 4294901760
        %1094 = vmatmul.mubr.f32.gmra.mrb[0].mxu0 %v1093
        %v1095 = vpop.f32.mrb[0].mxu0
        %v1096 = vadd.f32 %v1009, %v1095
        %v1097 = vpop.f32.mrb[0].mxu0
        %1098 = vdwg.mxu0
        %1099 = vmatprep.subr.mxu0 0.0
        %1100 = vmatpush1.msra.mxu0 %v170
        %1101 = vmatprep.subr.mxu0 0.0
        %1102 = vmatpush1.msra.mxu0 %v171
        %1103 = vmatprep.subr.mxu0 0.0
        %1104 = vmatpush1.msra.mxu0 %v172
        %1105 = vmatprep.subr.mxu0 0.0
        %1106 = vmatpush1.msra.mxu0 %v173
        %1107 = vmatprep.subr.mxu0 0.0
        %1108 = vmatpush1.msra.mxu0 %v174
        %1109 = vmatprep.subr.mxu0 0.0
        %1110 = vmatpush1.msra.mxu0 %v175
        %1111 = vmatprep.subr.mxu0 0.0
        %1112 = vmatpush1.msra.mxu0 %v176
        %1113 = vmatprep.subr.mxu0 0.0
        %1114 = vmatpush1.msra.mxu0 %v177
        %1115 = vmatprep.subr.mxu0 0.0
        %1116 = vmatpush1.msra.mxu0 0.0
        %1117 = vmatprep.subr.mxu0 0.0
        %1118 = vmatpush1.msra.mxu0 0.0
        %1119 = vmatprep.subr.mxu0 0.0
        %1120 = vmatpush1.msra.mxu0 0.0
        %1121 = vmatprep.subr.mxu0 0.0
        %1122 = vmatpush1.msra.mxu0 0.0
        %1123 = vmatprep.subr.mxu0 0.0
        %1124 = vmatpush1.msra.mxu0 0.0
        %1125 = vmatprep.subr.mxu0 0.0
        %1126 = vmatpush1.msra.mxu0 0.0
        %1127 = vmatprep.subr.mxu0 0.0
        %1128 = vmatpush1.msra.mxu0 0.0
        %1129 = vmatprep.subr.mxu0 0.0
        %1130 = vmatpush1.msra.mxu0 0.0
        %1131 = vmatprep.subr.mxu0 0.0
        %1132 = vmatpush1.msra.mxu0 0.0
        %1133 = vmatprep.subr.mxu0 0.0
        %1134 = vmatpush1.msra.mxu0 0.0
        %1135 = vmatprep.subr.mxu0 0.0
        %1136 = vmatpush1.msra.mxu0 0.0
        %1137 = vmatprep.subr.mxu0 0.0
        %1138 = vmatpush1.msra.mxu0 0.0
        %1139 = vmatprep.subr.mxu0 0.0
        %1140 = vmatpush1.msra.mxu0 0.0
        %1141 = vmatprep.subr.mxu0 0.0
        %1142 = vmatpush1.msra.mxu0 0.0
        %1143 = vmatprep.subr.mxu0 0.0
        %1144 = vmatpush1.msra.mxu0 0.0
        %1145 = vmatprep.subr.mxu0 0.0
        %1146 = vmatpush1.msra.mxu0 0.0
        %1147 = vmatprep.subr.mxu0 0.0
        %1148 = vmatpush1.msra.mxu0 0.0
        %1149 = vmatprep.subr.mxu0 0.0
        %1150 = vmatpush1.msra.mxu0 0.0
        %1151 = vmatprep.subr.mxu0 0.0
        %1152 = vmatpush1.msra.mxu0 0.0
        %1153 = vmatprep.subr.mxu0 0.0
        %1154 = vmatpush1.msra.mxu0 0.0
        %1155 = vmatprep.subr.mxu0 0.0
        %1156 = vmatpush1.msra.mxu0 0.0
        %1157 = vmatprep.subr.mxu0 0.0
        %1158 = vmatpush1.msra.mxu0 0.0
        %1159 = vmatprep.subr.mxu0 0.0
        %1160 = vmatpush1.msra.mxu0 0.0
        %1161 = vmatprep.subr.mxu0 0.0
        %1162 = vmatpush1.msra.mxu0 0.0
        %1163 = vmatprep.mubr.f32.mxu0 0.0
        %v1164 = vand.u32 %v679, 4294901760
        %1165 = vmatmul.mubr.f32.gmra.mrb[0].mxu0 %v1164
        %v1166 = vpop.f32.mrb[0].mxu0
        %v1167 = vadd.f32 %v1096, %v1166
        %v1168 = vpop.f32.mrb[0].mxu0
        %1169 = vdwg.mxu0
        %v1170 = vmul.f32 %v674, 0.1
        %v1171 = vadd.f32 %v1170, %v183
        %v1172 = vmul.f32 %v674, %v1170
        %v1173 = vsub.f32 %v1167, %v1172
        %v1174 = vmul.f32 %v1173, 0.11111111
        %v1175 = vmax.f32 %v1174, 0.0
        %v1176 = vrsqrt.pop %v1175
        %v1177 = vmul.f32 %v1171, %v1176
        %vm1178 = vcmask 48128
        %1179 = vst.msk [vmem:[%s131] sm:$0xff] %vm1178, %v1177
        %p1180 = scmp.lt.s32.totalorder %s15, 1
        %s1181 = scalar_select %p1180, %s15, 1
        %s1182 = smul.addr %s1181, 8
        %s1183 = scalar_lea.vmem %s1, %s1182
        // Predicated region
        $region29: #{tpu_custom_call.1} parent=23 // pred_check
          %p1184 = pneg %p59
        $region30: #{tpu_custom_call.1} parent=23 // pred_check_branch
          %1186 = sbr.rel (%p1184) target = $region32
        $region31: #{tpu_custom_call.1} parent=23 // pred_region
          _
        $region32: #{tpu_custom_call.1} parent=23 // pred_fallthru
          _
      $region24: #{tpu_custom_call.1} parent=5 // pred_fallthru
        _
      %p1187 = scmp.le.s32.totalorder 2, %s10
      // Predicated region
      $region33: #{tpu_custom_call.1} parent=5 // pred_check
        %p1188 = pneg %p1187
      $region34: #{tpu_custom_call.1} parent=5 // pred_check_branch
        %1190 = sbr.rel (%p1188) target = $region36
      $region35: #{tpu_custom_call.1} parent=5 // pred_region
        %s1191 = ssub.s32 %s10, 2
        // Predicated region
        $region37: #{tpu_custom_call.1} parent=35 // pred_check
          %p1192 = pneg %p65
        $region38: #{tpu_custom_call.1} parent=35 // pred_check_branch
          %1194 = sbr.rel (%p1192) target = $region40
        $region39: #{tpu_custom_call.1} parent=35 // pred_region
          %p1195 = scmp.lt.s32.totalorder %s16, 1
          %s1196 = scalar_select %p1195, %s16, 1
          %s1197 = smul.addr %s1196, 8
          %s1198 = scalar_lea.vmem %s1, %s1197
        $region40: #{tpu_custom_call.1} parent=35 // pred_fallthru
          _
      $region36: #{tpu_custom_call.1} parent=5 // pred_fallthru
        _
    $region6: #{tpu_custom_call.1} parent=1 // loop_footer
      %s14 = sadd.s32 1, %s10
    $region7: #{tpu_custom_call.1} parent=1 // loop_footer_branch
      %9 = sbr.rel target = $region3
    $region8: #{tpu_custom_call.1} parent=1 // loop_exit
      _
    %1199 = vsyncpa [#allocation3], 1
    %s1200 = scalar_lea.sflag [#allocation3], 1
    %1201 = vsyncpa %s1200, 1

</llo_original>
